<compile_context>
chip_gen: v7x
topology: tpu7x:2x2x1
jax: 0.10.0
libtpu: 0.0.40
codegen_flags: <defaults>
</compile_context>

<pallas_src>
import functools

import jax
import jax.numpy as jnp
from jax import lax
from jax.experimental import pallas as pl
from jax.experimental.pallas import tpu as pltpu


def _lane_fold(x, lanes):
    """Sum a (tm, tn) tile over lane-chunks of width `lanes` -> (tm, lanes).

    Static slices + VPU adds only; avoids cross-lane (XLU) reductions and keeps
    the partial-sum output lane-dense.
    """
    tm, tn = x.shape
    acc = x[:, 0:lanes]
    for k in range(1, tn // lanes):
        acc = acc + x[:, k * lanes:(k + 1) * lanes]
    return acc


def _siglip_tile_kernel(img_ref, txt_ref, scale_ref, bias_ref, out_ref, *, lanes):
    j = pl.program_id(1)  # col block ("arbitrary" reduction axis)

    # Output block is resident across the j axis -> on-chip accumulator.
    @pl.when(j == 0)
    def _():
        out_ref[...] = jnp.zeros_like(out_ref)

    scale = scale_ref[0, 0]
    bias = bias_ref[0, 0]

    # logits_tile = scale * img_tile @ txt_tile.T + bias
    # Contract directly on the feature axis of both operands (no transposed
    # copy of the text tile); bf16 operands feed the MXU, f32 accumulation.
    logits = lax.dot_general(
        img_ref[...],
        txt_ref[...],
        dimension_numbers=(((1,), (1,)), ((), ())),
        preferred_element_type=jnp.float32,
    )
    logits = logits * scale + bias

    # Stable softplus(z) = max(z, 0) + log1p(exp(-|z|))  ( == -logsigmoid(-z) )
    sp = jnp.maximum(logits, 0.0) + jnp.log1p(jnp.exp(-jnp.abs(logits)))
    out_ref[...] += _lane_fold(sp, lanes)


def _pick_tile(n, want, *, split=False):
    """Largest divisor of n that is <= want, a multiple of 8 (sublane-aligned).

    With split=True the tile is additionally capped at n // 2 (when that is
    still a valid tile) so the row grid has >= 2 blocks for v7x's two cores.
    Falls back to the full extent n if no aligned divisor exists.
    """
    cap = min(want, n)
    if split and n % 2 == 0 and (n // 2) % 8 == 0:
        cap = min(cap, n // 2)
    for t in range(cap, 7, -1):
        if n % t == 0 and t % 8 == 0:
            return t
    return n


@functools.partial(jax.jit, static_argnames=("tm", "tn", "text_buffers"))
def siglip_loss(image_features, text_features, logit_scale, logit_bias,
                *, tm=1024, tn=512, text_buffers=2):
    """Single-device SigLIP sigmoid loss. Returns (loss, {'loss': loss})."""
    n, d = image_features.shape
    assert text_features.shape == (n, d)

    in_bytes = image_features.dtype.itemsize

    # ---- tile selection (static, shape-level) ------------------------------
    tm_eff = _pick_tile(n, tm, split=True)    # large row tile, but grid_m >= 2
    tn_eff = _pick_tile(n, tn, split=False)

    # Per-generation VMEM budget: v7x has 64 MiB / TC, v5e/v6e have 128 MiB.
    try:
        phys_vmem = pltpu.get_tpu_info().vmem_capacity_bytes
    except Exception:
        phys_vmem = 64 * 2**20  # conservative: assume v7x
    vmem_cap = int(min(96 * 2**20, (phys_vmem * 3) // 4))

    def _vmem_est(tm_, tn_, lanes_):
        return (2 * tm_ * d * in_bytes              # image tile, double-buffered
                + text_buffers * tn_ * d * in_bytes  # text tile buffers
                + 2 * tm_ * lanes_ * 4               # partial-sum output block
                + 3 * tm_ * tn_ * 4)                 # f32 logits / softplus temps

    # Shrink tiles if the estimated footprint would not fit the budget.
    while True:
        lanes = 128 if tn_eff % 128 == 0 else tn_eff
        est = _vmem_est(tm_eff, tn_eff, lanes)
        if 2 * est <= vmem_cap:
            break
        if tn_eff >= tm_eff and tn_eff > 128 and (tn_eff // 2) % 8 == 0:
            tn_eff //= 2
        elif tm_eff > 128 and (tm_eff // 2) % 8 == 0:
            tm_eff //= 2
        else:
            break

    grid_m, grid_n = n // tm_eff, n // tn_eff
    vmem_limit = int(min(max(2 * est, 16 * 2**20), vmem_cap))

    scale = jnp.reshape(jnp.asarray(logit_scale, dtype=jnp.float32), (1, 1))
    bias = jnp.reshape(jnp.asarray(logit_bias, dtype=jnp.float32), (1, 1))

    # bytes_accessed: image is fetched once per row block (index (i, 0) is
    # constant across j), text is re-streamed once per row block.
    cost = pl.CostEstimate(
        flops=2 * n * n * d + 4 * n * n,
        transcendentals=2 * n * n,                 # exp + log1p per logit
        bytes_accessed=(n * d * in_bytes
                        + n * d * in_bytes * grid_m
                        + n * lanes * 4),
    )

    txt_spec_kwargs = {}
    if text_buffers != 2:
        # Deeper buffering for the (now larger) text DMA on bandwidth-poor parts.
        txt_spec_kwargs["pipeline_mode"] = pl.Buffered(text_buffers)
    txt_spec = pl.BlockSpec((tn_eff, d), lambda i, j: (j, 0), **txt_spec_kwargs)

    partials = pl.pallas_call(
        functools.partial(_siglip_tile_kernel, lanes=lanes),
        out_shape=jax.ShapeDtypeStruct((n, lanes), jnp.float32),
        grid_spec=pltpu.PrefetchScalarGridSpec(
            num_scalar_prefetch=0,
            grid=(grid_m, grid_n),
            in_specs=[
                pl.BlockSpec((tm_eff, d), lambda i, j: (i, 0)),   # image rows
                txt_spec,                                         # text rows
                pl.BlockSpec(memory_space=pltpu.SMEM),            # logit_scale (1,1)
                pl.BlockSpec(memory_space=pltpu.SMEM),            # logit_bias  (1,1)
            ],
            out_specs=pl.BlockSpec((tm_eff, lanes), lambda i, j: (i, 0)),
        ),
        compiler_params=pltpu.CompilerParams(
            dimension_semantics=("parallel", "arbitrary"),
            vmem_limit_bytes=vmem_limit,
        ),
        cost_estimate=cost,
    )(image_features, text_features, scale, bias)

    # Diagonal / trace correction, done in plain JAX (O(N*D), negligible):
    #   trace(logits) = scale * sum_i <img_i, txt_i> + N * bias
    diag_dot = jnp.sum(image_features.astype(jnp.float32)
                       * text_features.astype(jnp.float32))
    trace = scale[0, 0] * diag_dot + jnp.float32(n) * bias[0, 0]

    loss = (jnp.sum(partials) - trace) / jnp.float32(n)
    return loss, {"loss": loss}


def _reference_loss(image_features, text_features, logit_scale, logit_bias):
    """Pure-JAX reference mirroring the PyTorch SigLipLoss._loss."""
    n = image_features.shape[0]
    logits = (jnp.float32(logit_scale)
              * jnp.dot(image_features, text_features.T,
                        preferred_element_type=jnp.float32)
              + jnp.float32(logit_bias))
    labels = 2.0 * jnp.eye(n, dtype=jnp.float32) - 1.0
    z = labels * logits
    log_sig = jnp.minimum(z, 0.0) - jnp.log1p(jnp.exp(-jnp.abs(z)))
    return -jnp.sum(log_sig) / n


if __name__ == "__main__":
    key = jax.random.PRNGKey(0)

    # SigLIP-typical parameters: scale ~ exp(log 10) = 10, bias = -10.
    logit_scale = jnp.float32(10.0)
    logit_bias = jnp.float32(-10.0)

    configs = [
        dict(N=16, D=128),                    # tiny: single col block, 2 row blocks
        dict(N=512, D=128),                   # default (large) tiles: 2x1 grid
        dict(N=512, D=128, tm=128, tn=128),   # explicit 4x4 grid: j-axis accumulation path
    ]

    for cfg in configs:
        N, D = cfg["N"], cfg["D"]
        key, k_img, k_txt = jax.random.split(key, 3)
        img = jax.random.normal(k_img, (N, D), dtype=jnp.float32)
        txt = jax.random.normal(k_txt, (N, D), dtype=jnp.float32)
        # L2-normalized features in bf16 (native training dtype).
        img = (img / jnp.linalg.norm(img, axis=-1, keepdims=True)).astype(jnp.bfloat16)
        txt = (txt / jnp.linalg.norm(txt, axis=-1, keepdims=True)).astype(jnp.bfloat16)

        kwargs = {k: cfg[k] for k in ("tm", "tn") if k in cfg}
        loss, loss_dict = siglip_loss(img, txt, logit_scale, logit_bias, **kwargs)
        loss = jax.block_until_ready(loss)

        ref = _reference_loss(img, txt, logit_scale, logit_bias)
        assert jnp.allclose(loss, ref, rtol=1e-4, atol=1e-3), (cfg, float(loss), float(ref))
        assert jnp.allclose(loss_dict["loss"], ref, rtol=1e-4, atol=1e-3)

    print("KERNEL_OK")
</pallas_src>

<mosaic_0001>
module attributes {stable_mosaic.version = 11 : i64} {
  func.func @_siglip_tile_kernel(%arg0: i32, %arg1: i32, %arg2: memref<8x128xbf16, #tpu.memory_space<vmem>>, %arg3: memref<16x128xbf16, #tpu.memory_space<vmem>>, %arg4: memref<1x1xf32, #tpu.memory_space<smem>>, %arg5: memref<1x1xf32, #tpu.memory_space<smem>>, %arg6: memref<8x16xf32, #tpu.memory_space<vmem>>) attributes {dimension_semantics = [#tpu.dimension_semantics<parallel>, #tpu.dimension_semantics<arbitrary>], iteration_bounds = array<i64: 2, 1>, scalar_prefetch = 0 : i64, scratch_operands = 0 : i64, tpu.core_type = #tpu.core_type<tc>, window_params = [{transform_indices = @transform_0, window_bounds = array<i64: 8, 128>}, {transform_indices = @transform_1, window_bounds = array<i64: 16, 128>}, {transform_indices = @transform_2, window_bounds = array<i64: 1, 1>}, {transform_indices = @transform_3, window_bounds = array<i64: 1, 1>}, {transform_indices = @transform_4, window_bounds = array<i64: 8, 16>}]} {
    %c0_i32 = arith.constant 0 : i32
    %0 = arith.cmpi eq, %arg1, %c0_i32 : i32
    %1 = arith.extui %0 : i1 to i32
    %c0_i32_0 = arith.constant 0 : i32
    %2 = arith.cmpi ne, %1, %c0_i32_0 : i32
    scf.if %2 {
      %cst_14 = arith.constant 0.000000e+00 : f32
      %23 = vector.broadcast %cst_14 : f32 to vector<8x16xf32>
      %c0_15 = arith.constant 0 : index
      %c0_16 = arith.constant 0 : index
      %24 = vector.load %arg6[%c0_15, %c0_16] : memref<8x16xf32, #tpu.memory_space<vmem>>, vector<8x16xf32>
      tpu.vector_store %arg6[%c0_15, %c0_16], %23 {strides = array<i32>} : memref<8x16xf32, #tpu.memory_space<vmem>>, vector<8x16xf32>,
    } else {
    }
    %c0 = arith.constant 0 : index
    %c0_1 = arith.constant 0 : index
    %3 = memref.load %arg4[%c0, %c0_1] : memref<1x1xf32, #tpu.memory_space<smem>>
    %c0_2 = arith.constant 0 : index
    %c0_3 = arith.constant 0 : index
    %4 = memref.load %arg5[%c0_2, %c0_3] : memref<1x1xf32, #tpu.memory_space<smem>>
    %c0_4 = arith.constant 0 : index
    %c0_5 = arith.constant 0 : index
    %5 = vector.load %arg2[%c0_4, %c0_5] : memref<8x128xbf16, #tpu.memory_space<vmem>>, vector<8x128xbf16>
    %c0_6 = arith.constant 0 : index
    %c0_7 = arith.constant 0 : index
    %6 = vector.load %arg3[%c0_6, %c0_7] : memref<16x128xbf16, #tpu.memory_space<vmem>>, vector<16x128xbf16>
    %cst = arith.constant dense<0.000000e+00> : vector<8x16xf32>
    %7 = tpu.matmul %5, %6, %cst {dimension_numbers = #tpu.dot_dimension_numbers<[1], [1], [0], [0], [0, 0, 1, 0], [], []>} : vector<8x128xbf16>, vector<16x128xbf16>, vector<8x16xf32> -> vector<8x16xf32>
    %8 = vector.broadcast %3 : f32 to vector<8x16xf32>
    %9 = arith.mulf %7, %8 : vector<8x16xf32>
    %10 = vector.broadcast %4 : f32 to vector<8x16xf32>
    %11 = arith.addf %9, %10 : vector<8x16xf32>
    %cst_8 = arith.constant 0.000000e+00 : f32
    %12 = vector.broadcast %cst_8 : f32 to vector<8x16xf32>
    %13 = arith.maximumf %11, %12 : vector<8x16xf32>
    %14 = math.absf %11 : vector<8x16xf32>
    %cst_9 = arith.constant 0.000000e+00 : f32
    %15 = vector.broadcast %cst_9 : f32 to vector<8x16xf32>
    %16 = arith.subf %15, %14 : vector<8x16xf32>
    %17 = math.exp %16 : vector<8x16xf32>
    %18 = math.log1p %17 : vector<8x16xf32>
    %19 = arith.addf %13, %18 : vector<8x16xf32>
    %c0_10 = arith.constant 0 : index
    %c0_11 = arith.constant 0 : index
    %20 = vector.load %arg6[%c0_10, %c0_11] : memref<8x16xf32, #tpu.memory_space<vmem>>, vector<8x16xf32>
    %21 = arith.addf %20, %19 : vector<8x16xf32>
    %c0_12 = arith.constant 0 : index
    %c0_13 = arith.constant 0 : index
    %22 = vector.load %arg6[%c0_12, %c0_13] : memref<8x16xf32, #tpu.memory_space<vmem>>, vector<8x16xf32>
    tpu.vector_store %arg6[%c0_12, %c0_13], %21 {strides = array<i32>} : memref<8x16xf32, #tpu.memory_space<vmem>>, vector<8x16xf32>,
    return
  }
  func.func @transform_0(%arg0: i32, %arg1: i32) -> (i32, i32) {
    %c0_i32 = arith.constant 0 : i32
    %c0_i32_0 = arith.constant 0 : i32
    return %arg0, %c0_i32 : i32, i32
  }
  func.func @transform_1(%arg0: i32, %arg1: i32) -> (i32, i32) {
    %c0_i32 = arith.constant 0 : i32
    %c0_i32_0 = arith.constant 0 : i32
    return %arg1, %c0_i32 : i32, i32
  }
  func.func @transform_2(%arg0: i32, %arg1: i32) -> (i32, i32) {
    %c0_i32 = arith.constant 0 : i32
    %c0_i32_0 = arith.constant 0 : i32
    %c0_i32_1 = arith.constant 0 : i32
    return %c0_i32, %c0_i32_0 : i32, i32
  }
  func.func @transform_3(%arg0: i32, %arg1: i32) -> (i32, i32) {
    %c0_i32 = arith.constant 0 : i32
    %c0_i32_0 = arith.constant 0 : i32
    %c0_i32_1 = arith.constant 0 : i32
    return %c0_i32, %c0_i32_0 : i32, i32
  }
  func.func @transform_4(%arg0: i32, %arg1: i32) -> (i32, i32) {
    %c0_i32 = arith.constant 0 : i32
    %c0_i32_0 = arith.constant 0 : i32
    return %arg0, %c0_i32 : i32, i32
  }
}

</mosaic_0001>

<llo_original>
// kernel: siglip_loss.1
$region0: #{siglip_loss.1}
  #allocation0 [shape = 'u32[]', space=smem, size = 0x4, offset = 0x4, fixed_abs, tag = 'smem constant byte address 0x4 - core index']
  #allocation1 [shape = 'u32[144,128]{1,0:T(1,128)}', space=vmem, size = 0x12000, scoped, tag = 'internal scratch']
  #allocation2 [shape = 'f32[1,1]{1,0:T(1,128)S(6)}', space=smem, size = 0x200, scoped, tag = 'scoped memory for siglip_loss.1']
  #allocation3 [shape = 'f32[1,1]{1,0:T(1,128)S(6)}', space=smem, size = 0x200, scoped, tag = 'scoped memory for siglip_loss.1']
  %s0 = inlined_call_operand.vmem [shape: bf16[16,128], index: 0, kind: input, shape index: {}]
  %s1 = inlined_call_operand.vmem [shape: bf16[16,128], index: 1, kind: input, shape index: {}]
  %s2 = inlined_call_operand.<no memory space> [shape: f32[1,1], index: 2, kind: input, shape index: {}]
  %s3 = inlined_call_operand.<no memory space> [shape: f32[1,1], index: 3, kind: input, shape index: {}]
  %s4 = inlined_call_operand.vmem [shape: f32[16,16], index: 4, kind: output, shape index: {}]
  %s5 = sld [smem:[#allocation0]]
  $region53: #{siglip_loss.1} parent=0
    _
  %s7 = ssub.s32 1, %s5
  %s8 = scalar_select 0, %s7, %s5
  %9 = sst [smem:[#allocation2]] %s2
  %10 = sst [smem:[#allocation3]] %s3
  loop: start=0, step=1, limit=4
  $region2: #{siglip_loss.1} parent=0 // loop_pre_header
    _
  $region3: #{siglip_loss.1} parent=0 // loop_header
    %s12 = sphi 0, %s16
    %p13 = scmp.ge.s32.totalorder %s12, 4
    %s19 = sphi 0, %s31
    %s20 = sphi 0, %s27
    %s21 = sphi 0, %s19
    %s22 = sphi 0, %s20
    %s23 = sphi 0, %s21
    %s24 = sphi 0, %s22
    %s34 = sphi 0, %s36
    %s37 = sphi 0, %s34
    %s38 = sphi 0, %s37
    %s54 = sphi 0, %s38
    %s60 = sphi 0, %s62
    %s63 = sphi 0, %s60
    %s64 = sphi 0, %s63
    %s80 = sphi 0, %s64
    %s84 = sphi 0, %s84
    %s86 = sphi 0, %s84
    %s87 = sphi 0, %s86
    %s101 = sphi 0, %s87
    %s105 = sphi 0, %s105
    %s107 = sphi 0, %s105
    %s108 = sphi 0, %s107
    %s122 = sphi 0, %s108
    %s128 = sphi 0, %s130
    %s131 = sphi 0, %s128
    %s132 = sphi 0, %s131
    %s148 = sphi 0, %s132
  $region4: #{siglip_loss.1} parent=0 // loop_header_branch
    %15 = sbr.rel (%p13) target = $region8
  $region5: #{siglip_loss.1} parent=0 // loop_body
    %s17 = ssub.s32 %s12, 1
    %s18 = ssub.s32 %s12, 2
    %s25 = sadd.s32 1, %s20
    %p26 = scmp.ge.s32.totalorder %s25, 1
    %s27 = scalar_select %p26, 0, %s25
    %s28 = sadd.s32 1, %s19
    %s29 = scalar_select %p26, %s28, %s19
    %p30 = scmp.ge.s32.totalorder %s29, 2
    %s31 = scalar_select %p30, 0, %s29
    %s32 = ssub.s32 %s19, %s31
    %p33 = scmp.eq.s32.totalorder %s32, 0
    %s35 = sadd.s32 %s34, 1
    %s36 = scalar_select %p33, %s34, %s35
    %p39 = pneg %p33
    %p40 = scmp.eq.s32.totalorder %s12, 1
    %p41 = por %p39, %p40
    %p42 = scmp.ne.s32.totalorder %s34, %s37
    %p43 = scmp.eq.s32.totalorder %s12, 0
    %p44 = por %p42, %p43
    %p45 = scmp.ne.s32.totalorder %s34, %s37
    %p46 = scmp.eq.s32.totalorder %s17, 1
    %p47 = por %p45, %p46
    %p48 = scmp.ne.s32.totalorder %s37, %s38
    %p49 = scmp.eq.s32.totalorder %s17, 0
    %p50 = por %p48, %p49
    %p51 = scmp.ne.s32.totalorder %s37, %s38
    %p52 = scmp.eq.s32.totalorder %s18, 1
    %p53 = por %p51, %p52
    %p55 = scmp.ne.s32.totalorder %s38, %s54
    %p56 = scmp.eq.s32.totalorder %s18, 0
    %p57 = por %p55, %p56
    %s58 = ssub.s32 %s20, %s27
    %p59 = scmp.eq.s32.totalorder %s58, 0
    %s61 = sadd.s32 %s60, 1
    %s62 = scalar_select %p59, %s60, %s61
    %p65 = pneg %p59
    %p66 = scmp.eq.s32.totalorder %s12, 1
    %p67 = por %p65, %p66
    %p68 = scmp.ne.s32.totalorder %s60, %s63
    %p69 = scmp.eq.s32.totalorder %s12, 0
    %p70 = por %p68, %p69
    %p71 = scmp.ne.s32.totalorder %s60, %s63
    %p72 = scmp.eq.s32.totalorder %s17, 1
    %p73 = por %p71, %p72
    %p74 = scmp.ne.s32.totalorder %s63, %s64
    %p75 = scmp.eq.s32.totalorder %s17, 0
    %p76 = por %p74, %p75
    %p77 = scmp.ne.s32.totalorder %s63, %s64
    %p78 = scmp.eq.s32.totalorder %s18, 1
    %p79 = por %p77, %p78
    %p81 = scmp.ne.s32.totalorder %s64, %s80
    %p82 = scmp.eq.s32.totalorder %s18, 0
    %p83 = por %p81, %p82
    %s85 = sadd.s32 %s84, 1
    %p88 = scmp.eq.s32.totalorder %s12, 1
    %p89 = scmp.ne.s32.totalorder %s84, %s86
    %p90 = scmp.eq.s32.totalorder %s12, 0
    %p91 = por %p89, %p90
    %p92 = scmp.ne.s32.totalorder %s84, %s86
    %p93 = scmp.eq.s32.totalorder %s17, 1
    %p94 = por %p92, %p93
    %p95 = scmp.ne.s32.totalorder %s86, %s87
    %p96 = scmp.eq.s32.totalorder %s17, 0
    %p97 = por %p95, %p96
    %p98 = scmp.ne.s32.totalorder %s86, %s87
    %p99 = scmp.eq.s32.totalorder %s18, 1
    %p100 = por %p98, %p99
    %p102 = scmp.ne.s32.totalorder %s87, %s101
    %p103 = scmp.eq.s32.totalorder %s18, 0
    %p104 = por %p102, %p103
    %s106 = sadd.s32 %s105, 1
    %p109 = scmp.eq.s32.totalorder %s12, 1
    %p110 = scmp.ne.s32.totalorder %s105, %s107
    %p111 = scmp.eq.s32.totalorder %s12, 0
    %p112 = por %p110, %p111
    %p113 = scmp.ne.s32.totalorder %s105, %s107
    %p114 = scmp.eq.s32.totalorder %s17, 1
    %p115 = por %p113, %p114
    %p116 = scmp.ne.s32.totalorder %s107, %s108
    %p117 = scmp.eq.s32.totalorder %s17, 0
    %p118 = por %p116, %p117
    %p119 = scmp.ne.s32.totalorder %s107, %s108
    %p120 = scmp.eq.s32.totalorder %s18, 1
    %p121 = por %p119, %p120
    %p123 = scmp.ne.s32.totalorder %s108, %s122
    %p124 = scmp.eq.s32.totalorder %s18, 0
    %p125 = por %p123, %p124
    %s126 = ssub.s32 %s19, %s31
    %p127 = scmp.eq.s32.totalorder %s126, 0
    %s129 = sadd.s32 %s128, 1
    %s130 = scalar_select %p127, %s128, %s129
    %p133 = pneg %p127
    %p134 = scmp.eq.s32.totalorder %s12, 1
    %p135 = por %p133, %p134
    %p136 = scmp.ne.s32.totalorder %s128, %s131
    %p137 = scmp.eq.s32.totalorder %s12, 0
    %p138 = por %p136, %p137
    %p139 = scmp.ne.s32.totalorder %s128, %s131
    %p140 = scmp.eq.s32.totalorder %s17, 1
    %p141 = por %p139, %p140
    %p142 = scmp.ne.s32.totalorder %s131, %s132
    %p143 = scmp.eq.s32.totalorder %s17, 0
    %p144 = por %p142, %p143
    %p145 = scmp.ne.s32.totalorder %s131, %s132
    %p146 = scmp.eq.s32.totalorder %s18, 1
    %p147 = por %p145, %p146
    %p149 = scmp.ne.s32.totalorder %s132, %s148
    %p150 = scmp.eq.s32.totalorder %s18, 0
    %p151 = por %p149, %p150
    %p152 = scmp.le.s32.totalorder 1, %s12
    %p153 = scmp.lt.s32.totalorder %s12, 3
    %p154 = pnand %p152, %p153
    %p155 = pneg %p154
    // Predicated region
    $region9: #{siglip_loss.1} parent=5 // pred_check
      _
    $region10: #{siglip_loss.1} parent=5 // pred_check_branch
      %157 = sbr.rel (%p154) target = $region12
    $region11: #{siglip_loss.1} parent=5 // pred_region
      %s158 = ssub.s32 %s12, 1
      // Predicated region
      $region13: #{siglip_loss.1} parent=11 // pred_check
        %p159 = pneg %p76
      $region14: #{siglip_loss.1} parent=11 // pred_check_branch
        %161 = sbr.rel (%p159) target = $region16
      $region15: #{siglip_loss.1} parent=11 // pred_region
        %s162 = smul.u32 2, %s22
        %p163 = scmp.lt.s32.totalorder %s162, 1
        %s164 = scalar_select %p163, %s162, 1
        %s165 = smul.addr %s164, 4
        %s166 = scalar_lea.vmem %s1, %s165
        %s167 = smul.u32 2, %s22
      $region16: #{siglip_loss.1} parent=11 // pred_fallthru
        _
      // Predicated region
      $region17: #{siglip_loss.1} parent=11 // pred_check
        %p168 = pneg %p97
      $region18: #{siglip_loss.1} parent=11 // pred_check_branch
        %170 = sbr.rel (%p168) target = $region20
      $region19: #{siglip_loss.1} parent=11 // pred_region
        _
      $region20: #{siglip_loss.1} parent=11 // pred_fallthru
        _
      // Predicated region
      $region21: #{siglip_loss.1} parent=11 // pred_check
        %p171 = pneg %p118
      $region22: #{siglip_loss.1} parent=11 // pred_check_branch
        %173 = sbr.rel (%p171) target = $region24
      $region23: #{siglip_loss.1} parent=11 // pred_region
        _
      $region24: #{siglip_loss.1} parent=11 // pred_fallthru
        _
    $region12: #{siglip_loss.1} parent=5 // pred_fallthru
      _
    %p174 = scmp.lt.s32.totalorder %s12, 2
    // Predicated region
    $region25: #{siglip_loss.1} parent=5 // pred_check
      %p175 = pneg %p174
    $region26: #{siglip_loss.1} parent=5 // pred_check_branch
      %177 = sbr.rel (%p175) target = $region28
    $region27: #{siglip_loss.1} parent=5 // pred_region
      // Predicated region
      $region29: #{siglip_loss.1} parent=27 // pred_check
        %p178 = pneg %p44
      $region30: #{siglip_loss.1} parent=27 // pred_check_branch
        %180 = sbr.rel (%p178) target = $region32
      $region31: #{siglip_loss.1} parent=27 // pred_region
        %p181 = scmp.lt.s32.totalorder %s19, 1
        %s182 = scalar_select %p181, %s19, 1
        %s183 = smul.addr %s182, 4
        %s184 = scalar_lea.vmem %s0, %s183
      $region32: #{siglip_loss.1} parent=27 // pred_fallthru
        _
    $region28: #{siglip_loss.1} parent=5 // pred_fallthru
      _
    %p185 = scmp.le.s32.totalorder 1, %s12
    %p186 = scmp.lt.s32.totalorder %s12, 3
    %p187 = pnand %p185, %p186
    %p188 = pneg %p187
    // Predicated region
    $region33: #{siglip_loss.1} parent=5 // pred_check
      _
    $region34: #{siglip_loss.1} parent=5 // pred_check_branch
      %190 = sbr.rel (%p187) target = $region36
    $region35: #{siglip_loss.1} parent=5 // pred_region
      %s191 = ssub.s32 %s12, 1
      %p192 = scmp.lt.s32.totalorder %s21, 1
      %s193 = scalar_select %p192, %s21, 1
      %s194 = smul.addr %s193, 4
      %s195 = scalar_lea.vmem %s0, %s194
      %p196 = pneg %p50
      %p197 = pneg %p47
      %s198 = smul.u32 2, %s22
      %p199 = scmp.lt.s32.totalorder %s198, 1
      %s200 = scalar_select %p199, %s198, 1
      %s201 = smul.addr %s200, 4
      %s202 = scalar_lea.vmem %s1, %s201
      %p203 = pneg %p76
      %p204 = pneg %p73
      %p205 = pneg %p97
      %p206 = pneg %p94
      %p207 = pneg %p118
      %p208 = pneg %p115
      %p209 = pneg %p144
      %p210 = pneg %p141
      %p211 = scmp.lt.s32.totalorder %s21, 1
      %s212 = scalar_select %p211, %s21, 1
      %s213 = smul.addr %s212, 8
      %s214 = scalar_lea.vmem %s4, %s213
      %p215 = scmp.lt.s32.totalorder %s21, 1
      %s216 = scalar_select %p215, %s21, 1
      %s217 = smul.addr %s216, 4
      %s218 = scalar_lea.vmem %s0, %s217
      %s219 = smul.u32 2, %s22
      %p220 = scmp.lt.s32.totalorder %s219, 1
      %s221 = scalar_select %p220, %s219, 1
      %s222 = smul.addr %s221, 4
      %s223 = scalar_lea.vmem %s1, %s222
      %s224 = smul.u32 2, %s22
      %p225 = scmp.lt.s32.totalorder %s21, 1
      %s226 = scalar_select %p225, %s21, 1
      %s227 = smul.addr %s226, 8
      %s228 = scalar_lea.vmem %s4, %s227
      %p230 = scmp.eq.s32.totalorder %s22, 0
      // Predicated region
      $region37: #{siglip_loss.1} parent=35 // pred_check
        %p231 = pneg %p230
      $region38: #{siglip_loss.1} parent=35 // pred_check_branch
        %233 = sbr.rel (%p231) target = $region40
      $region39: #{siglip_loss.1} parent=35 // pred_region
        %vm234 = vcmask 130048
        %235 = vst.msk [vmem:[%s228] sm:$0xff] %vm234, 0.0
      $region40: #{siglip_loss.1} parent=35 // pred_fallthru
        _
      %s236 = sld [smem:[#allocation2]]
      %s237 = sld [smem:[#allocation3]]
      %v238 = vld [vmem:[%s218] sm:$0xf]
      %v239 = vld [vmem:[%s223] sm:$0xf]
      %v240 = vld [vmem:[%s223 + $0x4] sm:$0xf]
      %v243 = vunpack.c.l.b16 %v239
      %v244 = vunpack.c.l.b16 %v240
      %v245 = vpack.c.b16 %v244, %v243
      %247 = vmatprep.subr.bf16.mxu0 0
      %248 = vmatpush1.bf16.xpose.msra.mxu0 %v245
      %249 = vmatprep.subr.bf16.mxu0 0
      %250 = vmatpush1.bf16.xpose.msra.mxu0 0
      %251 = vmatprep.subr.bf16.mxu0 0
      %252 = vmatpush1.bf16.xpose.msra.mxu0 0
      %253 = vmatprep.subr.bf16.mxu0 0
      %254 = vmatpush1.bf16.xpose.msra.mxu0 0
      %255 = vmatprep.subr.bf16.mxu0 0
      %256 = vmatpush1.bf16.xpose.msra.mxu0 0
      %257 = vmatprep.subr.bf16.mxu0 0
      %258 = vmatpush1.bf16.xpose.msra.mxu0 0
      %259 = vmatprep.subr.bf16.mxu0 0
      %260 = vmatpush1.bf16.xpose.msra.mxu0 0
      %261 = vmatprep.subr.bf16.mxu0 0
      %262 = vmatpush1.bf16.xpose.msra.mxu0 0
      %263 = vmatprep.subr.bf16.mxu0 0
      %264 = vmatpush1.bf16.xpose.msra.mxu0 0
      %265 = vmatprep.subr.bf16.mxu0 0
      %266 = vmatpush1.bf16.xpose.msra.mxu0 0
      %267 = vmatprep.subr.bf16.mxu0 0
      %268 = vmatpush1.bf16.xpose.msra.mxu0 0
      %269 = vmatprep.subr.bf16.mxu0 0
      %270 = vmatpush1.bf16.xpose.msra.mxu0 0
      %271 = vmatprep.subr.bf16.mxu0 0
      %272 = vmatpush1.bf16.xpose.msra.mxu0 0
      %273 = vmatprep.subr.bf16.mxu0 0
      %274 = vmatpush1.bf16.xpose.msra.mxu0 0
      %275 = vmatprep.subr.bf16.mxu0 0
      %276 = vmatpush1.bf16.xpose.msra.mxu0 0
      %277 = vmatprep.subr.bf16.mxu0 0
      %278 = vmatpush1.bf16.xpose.msra.mxu0 0
      %279 = vmatprep.mubr.bf16.mxu0 0
      %280 = vmatmul.mubr.bf16.gmra.mrb[0].mxu0 %v238
      %v281 = vpop.f32.mrb[0].mxu0
      %v282 = vadd.f32 0.0, %v281
      %v283 = vpop.f32.mrb[0].mxu0
      %v284 = vpop.f32.mrb[0].mxu0
      %v285 = vpop.f32.mrb[0].mxu0
      %286 = vdwg.mxu0
      %v287 = vstv %s236
      %v288 = vmul.f32 %v282, %v287
      %v289 = vstv %s237
      %v290 = vadd.f32 %v288, %v289
      %v291 = vmax.f32 %v290, 0.0
      %v292 = vand.u32 2147483647, %v290
      %v293 = vsub.f32 0.0, %v292
      %v294 = vmul.f32 %v293, 1.442695
      %v295 = vpow.pop %v294
      %v296 = vadd.f32 %v295, 1.0
      %v297 = vlog2.pop %v296
      %v298 = vmul.f32 %v297, 0.6931472
      %v299 = vmul.f32 -0.5, %v295
      %v300 = vadd.f32 %v299, 1.0
      %v301 = vmul.f32 %v300, %v295
      %v302 = vand.u32 2147483647, %v295
      %vm303 = vcmp.lt.f32.partialorder %v302, 0.0004427343
      %v304 = vsel %vm303, %v301, %v298
      %v305 = vadd.f32 %v291, %v304
      %v306 = vld [vmem:[%s228] sm:$0xff]
      %v307 = vadd.f32 %v306, %v305
      %vm308 = vcmask 130048
      %309 = vst.msk [vmem:[%s228] sm:$0xff] %vm308, %v307
      %p310 = scmp.lt.s32.totalorder %s21, 1
      %s311 = scalar_select %p310, %s21, 1
      %s312 = smul.addr %s311, 8
      %s313 = scalar_lea.vmem %s4, %s312
      // Predicated region
      $region41: #{siglip_loss.1} parent=35 // pred_check
        %p314 = pneg %p141
      $region42: #{siglip_loss.1} parent=35 // pred_check_branch
        %316 = sbr.rel (%p314) target = $region44
      $region43: #{siglip_loss.1} parent=35 // pred_region
        _
      $region44: #{siglip_loss.1} parent=35 // pred_fallthru
        _
    $region36: #{siglip_loss.1} parent=5 // pred_fallthru
      _
    %p317 = scmp.le.s32.totalorder 2, %s12
    // Predicated region
    $region45: #{siglip_loss.1} parent=5 // pred_check
      %p318 = pneg %p317
    $region46: #{siglip_loss.1} parent=5 // pred_check_branch
      %320 = sbr.rel (%p318) target = $region48
    $region47: #{siglip_loss.1} parent=5 // pred_region
      %s321 = ssub.s32 %s12, 2
      // Predicated region
      $region49: #{siglip_loss.1} parent=47 // pred_check
        %p322 = pneg %p147
      $region50: #{siglip_loss.1} parent=47 // pred_check_branch
        %324 = sbr.rel (%p322) target = $region52
      $region51: #{siglip_loss.1} parent=47 // pred_region
        %p325 = scmp.lt.s32.totalorder %s23, 1
        %s326 = scalar_select %p325, %s23, 1
        %s327 = smul.addr %s326, 8
        %s328 = scalar_lea.vmem %s4, %s327
      $region52: #{siglip_loss.1} parent=47 // pred_fallthru
        _
    $region48: #{siglip_loss.1} parent=5 // pred_fallthru
      _
  $region6: #{siglip_loss.1} parent=0 // loop_footer
    %s16 = sadd.s32 1, %s12
  $region7: #{siglip_loss.1} parent=0 // loop_footer_branch
    %11 = sbr.rel target = $region3
  $region8: #{siglip_loss.1} parent=0 // loop_exit
    _

</llo_original>
